<compile_context>
chip_gen: v5e
topology: v5e:2x2
jax: 0.10.0
libtpu: 0.0.40
codegen_flags: <defaults>
</compile_context>

<pallas_src>
import functools

import jax
import jax.numpy as jnp
from jax.experimental import pallas as pl
from jax.experimental.pallas import tpu as pltpu

NUM_INPUTS = 2
NUM_OUTPUTS = 4
HIDDEN = 256
FUSED_HIDDEN = 2 * HIDDEN          # critic hidden | actor hidden
OUT_PAD = 128                      # lane-dense packed output width
MU_COLS = slice(0, NUM_OUTPUTS)    # columns 0..3 of the packed output
VALUE_COL = NUM_OUTPUTS            # column 4 of the packed output


def actor_critic_kernel(x_ref, w1_ref, b1_ref, w2_ref, b2_ref, out_ref):
    """One batch tile: x (TB, 2) -> packed output (TB, 128)."""
    x = x_ref[...].astype(jnp.float32)          # (TB, 2)
    w1 = w1_ref[...]                            # (2, 512)  [critic | actor]
    b1 = b1_ref[...]                            # (1, 512)

    # ---- layer 1 on the VPU: K=2 contraction as two broadcast FMAs ----
    h = x[:, 0:1] * w1[0:1, :] + x[:, 1:2] * w1[1:2, :] + b1   # (TB, 512)
    h = jnp.maximum(h, 0.0)                                    # ReLU

    # ---- layer 2: fused block-diagonal matmul -> lane-dense packed slab ----
    # w2 rows   0:256 -> column 4      (critic -> value)
    # w2 rows 256:512 -> columns 0:4   (actor  -> mu)
    out = jnp.dot(h, w2_ref[...], preferred_element_type=jnp.float32)
    out = out + b2_ref[...]
    out_ref[...] = out.astype(out_ref.dtype)


@functools.partial(jax.jit, static_argnames=("tile_b",))
def actor_critic_forward(x, packed_params, tile_b=1024):
    """Runs the ActorCritic forward pass. Returns (mu, std, value)."""
    w1, b1, w2, b2, log_std = packed_params
    B = x.shape[0]

    # Pad the batch to a multiple of the tile (tile must be a multiple of 8).
    b8 = max(8, ((B + 7) // 8) * 8)
    tb = min(int(tile_b), b8)
    tb = ((tb + 7) // 8) * 8
    bp = ((b8 + tb - 1) // tb) * tb
    if bp != B:
        x = jnp.pad(x, ((0, bp - B), (0, 0)))
    grid = (bp // tb,)

    flops = 2 * bp * FUSED_HIDDEN * (NUM_INPUTS + OUT_PAD)
    bytes_accessed = 4 * (bp * NUM_INPUTS + bp * OUT_PAD
                          + w1.size + b1.size + w2.size + b2.size)

    packed_out = pl.pallas_call(
        actor_critic_kernel,
        out_shape=jax.ShapeDtypeStruct((bp, OUT_PAD), jnp.float32),
        grid_spec=pltpu.PrefetchScalarGridSpec(
            num_scalar_prefetch=0,
            grid=grid,
            in_specs=[
                pl.BlockSpec((tb, NUM_INPUTS), lambda i: (i, 0)),        # x
                pl.BlockSpec((NUM_INPUTS, FUSED_HIDDEN), lambda i: (0, 0)),  # w1
                pl.BlockSpec((1, FUSED_HIDDEN), lambda i: (0, 0)),       # b1
                pl.BlockSpec((FUSED_HIDDEN, OUT_PAD), lambda i: (0, 0)), # w2
                pl.BlockSpec((1, OUT_PAD), lambda i: (0, 0)),            # b2
            ],
            out_specs=pl.BlockSpec((tb, OUT_PAD), lambda i: (i, 0)),
        ),
        compiler_params=pltpu.CompilerParams(
            dimension_semantics=("parallel",)),
        cost_estimate=pl.CostEstimate(
            flops=flops, transcendentals=0, bytes_accessed=bytes_accessed),
    )(x, w1, b1, w2, b2)

    mu = packed_out[:B, MU_COLS]
    value = packed_out[:B, VALUE_COL:VALUE_COL + 1]
    # std does not depend on x -> compute in the wrapper (perf review).
    std = jnp.broadcast_to(jnp.exp(log_std), mu.shape)
    return mu, std, value


def make_params(key):
    """Deterministic init mirroring init_weights: W ~ N(0, 0.1), b = 0.1,
    log_std = ones(1, num_outputs) * 0.0 (std=0.0 in the module ctor).
    Weights are stored transposed vs PyTorch: (in_features, out_features)."""
    k1, k2, k3, k4 = jax.random.split(key, 4)
    w1c = 0.1 * jax.random.normal(k1, (NUM_INPUTS, HIDDEN), jnp.float32)
    b1c = jnp.full((HIDDEN,), 0.1, jnp.float32)
    w2c = 0.1 * jax.random.normal(k2, (HIDDEN, 1), jnp.float32)
    b2c = jnp.full((1,), 0.1, jnp.float32)
    w1a = 0.1 * jax.random.normal(k3, (NUM_INPUTS, HIDDEN), jnp.float32)
    b1a = jnp.full((HIDDEN,), 0.1, jnp.float32)
    w2a = 0.1 * jax.random.normal(k4, (HIDDEN, NUM_OUTPUTS), jnp.float32)
    b2a = jnp.full((NUM_OUTPUTS,), 0.1, jnp.float32)
    log_std = jnp.zeros((1, NUM_OUTPUTS), jnp.float32)
    return dict(w1c=w1c, b1c=b1c, w2c=w2c, b2c=b2c,
                w1a=w1a, b1a=b1a, w2a=w2a, b2a=b2a, log_std=log_std)


def pack_params(p):
    """Fuse critic/actor layer-1 weights and build the block-diagonal
    layer-2 weight that writes [mu(4) | value(1) | 0...] in one matmul."""
    w1 = jnp.concatenate([p["w1c"], p["w1a"]], axis=1)            # (2, 512)
    b1 = jnp.concatenate([p["b1c"], p["b1a"]])[None, :]           # (1, 512)

    w2 = jnp.zeros((FUSED_HIDDEN, OUT_PAD), jnp.float32)
    w2 = w2.at[:HIDDEN, VALUE_COL:VALUE_COL + 1].set(p["w2c"])    # critic -> col 4
    w2 = w2.at[HIDDEN:, MU_COLS].set(p["w2a"])                    # actor  -> cols 0:4

    b2 = jnp.zeros((1, OUT_PAD), jnp.float32)
    b2 = b2.at[0, MU_COLS].set(p["b2a"])
    b2 = b2.at[0, VALUE_COL].set(p["b2c"][0])

    return (w1, b1, w2, b2, p["log_std"])


def reference_forward(x, p):
    hp = jax.lax.Precision.HIGHEST
    h_c = jnp.maximum(jnp.dot(x, p["w1c"], precision=hp) + p["b1c"], 0.0)
    value = jnp.dot(h_c, p["w2c"], precision=hp) + p["b2c"]
    h_a = jnp.maximum(jnp.dot(x, p["w1a"], precision=hp) + p["b1a"], 0.0)
    mu = jnp.dot(h_a, p["w2a"], precision=hp) + p["b2a"]
    std = jnp.broadcast_to(jnp.exp(p["log_std"]), mu.shape)
    return mu, std, value


if __name__ == "__main__":
    key = jax.random.PRNGKey(0)
    k_param, k_x = jax.random.split(key)
    raw_params = make_params(k_param)
    packed = pack_params(raw_params)

    # Small demo batch; tile_b=16 exercises a multi-step parallel grid.
    B = 48
    x = jax.random.normal(k_x, (B, NUM_INPUTS), jnp.float32)

    mu, std, value = actor_critic_forward(x, packed, tile_b=16)
    jax.block_until_ready((mu, std, value))

    # Sanity-check against a plain-JAX reference of the original module.
    mu_r, std_r, value_r = reference_forward(x, raw_params)
    assert mu.shape == (B, NUM_OUTPUTS) and value.shape == (B, 1)
    assert jnp.allclose(mu, mu_r, atol=1e-4), "mu mismatch"
    assert jnp.allclose(std, std_r, atol=1e-6), "std mismatch"
    assert jnp.allclose(value, value_r, atol=1e-4), "value mismatch"

    # Also exercise a non-multiple-of-8 batch (padding path).
    mu2, std2, value2 = actor_critic_forward(x[:11], packed, tile_b=16)
    jax.block_until_ready((mu2, std2, value2))
    mu2_r, std2_r, value2_r = reference_forward(x[:11], raw_params)
    assert jnp.allclose(mu2, mu2_r, atol=1e-4), "mu mismatch (padded)"
    assert jnp.allclose(value2, value2_r, atol=1e-4), "value mismatch (padded)"

    print("KERNEL_OK")
</pallas_src>

<mosaic_0001>
module attributes {stable_mosaic.version = 11 : i64} {
  func.func @actor_critic_kernel(%arg0: i32, %arg1: memref<16x2xf32, #tpu.memory_space<vmem>>, %arg2: memref<2x512xf32, #tpu.memory_space<vmem>>, %arg3: memref<1x512xf32, #tpu.memory_space<vmem>>, %arg4: memref<512x128xf32, #tpu.memory_space<vmem>>, %arg5: memref<1x128xf32, #tpu.memory_space<vmem>>, %arg6: memref<16x128xf32, #tpu.memory_space<vmem>>) attributes {dimension_semantics = [#tpu.dimension_semantics<parallel>], iteration_bounds = array<i64: 3>, scalar_prefetch = 0 : i64, scratch_operands = 0 : i64, tpu.core_type = #tpu.core_type<tc>, window_params = [{transform_indices = @transform_0, window_bounds = array<i64: 16, 2>}, {pipeline_mode = #tpu.pipeline_mode<synchronous>, transform_indices = @transform_1, window_bounds = array<i64: 2, 512>}, {pipeline_mode = #tpu.pipeline_mode<synchronous>, transform_indices = @transform_2, window_bounds = array<i64: 1, 512>}, {pipeline_mode = #tpu.pipeline_mode<synchronous>, transform_indices = @transform_3, window_bounds = array<i64: 512, 128>}, {pipeline_mode = #tpu.pipeline_mode<synchronous>, transform_indices = @transform_4, window_bounds = array<i64: 1, 128>}, {transform_indices = @transform_5, window_bounds = array<i64: 16, 128>}]} {
    %c0 = arith.constant 0 : index
    %c0_0 = arith.constant 0 : index
    %0 = vector.load %arg1[%c0, %c0_0] : memref<16x2xf32, #tpu.memory_space<vmem>>, vector<16x2xf32>
    %c0_1 = arith.constant 0 : index
    %c0_2 = arith.constant 0 : index
    %1 = vector.load %arg2[%c0_1, %c0_2] : memref<2x512xf32, #tpu.memory_space<vmem>>, vector<2x512xf32>
    %c0_3 = arith.constant 0 : index
    %c0_4 = arith.constant 0 : index
    %2 = vector.load %arg3[%c0_3, %c0_4] : memref<1x512xf32, #tpu.memory_space<vmem>>, vector<1x512xf32>
    %3 = vector.extract_strided_slice %0 {offsets = [0, 0], sizes = [16, 1], strides = [1, 1]} : vector<16x2xf32> to vector<16x1xf32>
    %4 = vector.extract_strided_slice %1 {offsets = [0, 0], sizes = [1, 512], strides = [1, 1]} : vector<2x512xf32> to vector<1x512xf32>
    %5 = vector.broadcast %3 : vector<16x1xf32> to vector<16x512xf32>
    %6 = vector.broadcast %4 : vector<1x512xf32> to vector<16x512xf32>
    %7 = arith.mulf %5, %6 : vector<16x512xf32>
    %8 = vector.extract_strided_slice %0 {offsets = [0, 1], sizes = [16, 1], strides = [1, 1]} : vector<16x2xf32> to vector<16x1xf32>
    %9 = vector.extract_strided_slice %1 {offsets = [1, 0], sizes = [1, 512], strides = [1, 1]} : vector<2x512xf32> to vector<1x512xf32>
    %10 = vector.broadcast %8 : vector<16x1xf32> to vector<16x512xf32>
    %11 = vector.broadcast %9 : vector<1x512xf32> to vector<16x512xf32>
    %12 = arith.mulf %10, %11 : vector<16x512xf32>
    %13 = arith.addf %7, %12 : vector<16x512xf32>
    %14 = vector.broadcast %2 : vector<1x512xf32> to vector<16x512xf32>
    %15 = arith.addf %13, %14 : vector<16x512xf32>
    %cst = arith.constant 0.000000e+00 : f32
    %16 = vector.broadcast %cst : f32 to vector<16x512xf32>
    %17 = arith.maximumf %15, %16 : vector<16x512xf32>
    %c0_5 = arith.constant 0 : index
    %c0_6 = arith.constant 0 : index
    %18 = vector.load %arg4[%c0_5, %c0_6] : memref<512x128xf32, #tpu.memory_space<vmem>>, vector<512x128xf32>
    %cst_7 = arith.constant dense<0.000000e+00> : vector<16x128xf32>
    %19 = tpu.matmul %17, %18, %cst_7 {dimension_numbers = #tpu.dot_dimension_numbers<[1], [0], [0], [1], [0, 0, 1, 1], [], []>} : vector<16x512xf32>, vector<512x128xf32>, vector<16x128xf32> -> vector<16x128xf32>
    %c0_8 = arith.constant 0 : index
    %c0_9 = arith.constant 0 : index
    %20 = vector.load %arg5[%c0_8, %c0_9] : memref<1x128xf32, #tpu.memory_space<vmem>>, vector<1x128xf32>
    %21 = vector.broadcast %20 : vector<1x128xf32> to vector<16x128xf32>
    %22 = arith.addf %19, %21 : vector<16x128xf32>
    %c0_10 = arith.constant 0 : index
    %c0_11 = arith.constant 0 : index
    %23 = vector.load %arg6[%c0_10, %c0_11] : memref<16x128xf32, #tpu.memory_space<vmem>>, vector<16x128xf32>
    tpu.vector_store %arg6[%c0_10, %c0_11], %22 {strides = array<i32>} : memref<16x128xf32, #tpu.memory_space<vmem>>, vector<16x128xf32>,
    return
  }
  func.func @transform_0(%arg0: i32) -> (i32, i32) {
    %c0_i32 = arith.constant 0 : i32
    %c0_i32_0 = arith.constant 0 : i32
    return %arg0, %c0_i32 : i32, i32
  }
  func.func @transform_1(%arg0: i32) -> (i32, i32) {
    %c0_i32 = arith.constant 0 : i32
    %c0_i32_0 = arith.constant 0 : i32
    %c0_i32_1 = arith.constant 0 : i32
    return %c0_i32, %c0_i32_0 : i32, i32
  }
  func.func @transform_2(%arg0: i32) -> (i32, i32) {
    %c0_i32 = arith.constant 0 : i32
    %c0_i32_0 = arith.constant 0 : i32
    %c0_i32_1 = arith.constant 0 : i32
    return %c0_i32, %c0_i32_0 : i32, i32
  }
  func.func @transform_3(%arg0: i32) -> (i32, i32) {
    %c0_i32 = arith.constant 0 : i32
    %c0_i32_0 = arith.constant 0 : i32
    %c0_i32_1 = arith.constant 0 : i32
    return %c0_i32, %c0_i32_0 : i32, i32
  }
  func.func @transform_4(%arg0: i32) -> (i32, i32) {
    %c0_i32 = arith.constant 0 : i32
    %c0_i32_0 = arith.constant 0 : i32
    %c0_i32_1 = arith.constant 0 : i32
    return %c0_i32, %c0_i32_0 : i32, i32
  }
  func.func @transform_5(%arg0: i32) -> (i32, i32) {
    %c0_i32 = arith.constant 0 : i32
    %c0_i32_0 = arith.constant 0 : i32
    return %arg0, %c0_i32 : i32, i32
  }
}

</mosaic_0001>

<llo_original>
// kernel: actor_critic_forward.1
$region0: #{actor_critic_forward.1}
  #allocation0 [shape = 'u32[]', space=smem, size = 0x4, offset = 0x4, fixed_abs, tag = 'smem constant byte address 0x4 - core index']
  #allocation1 [shape = 'u32[72,128]{1,0:T(1,128)}', space=vmem, size = 0x9000, scoped, tag = 'internal scratch']
  %s0 = inlined_call_operand.vmem [shape: f32[48,2], index: 0, kind: input, shape index: {}]
  %s1 = inlined_call_operand.vmem [shape: f32[2,512], index: 1, kind: input, shape index: {}]
  %s2 = inlined_call_operand.vmem [shape: f32[1,512], index: 2, kind: input, shape index: {}]
  %s3 = inlined_call_operand.hbm [shape: f32[512,128], index: 3, kind: input, shape index: {}]
  %s4 = inlined_call_operand.vmem [shape: f32[1,128], index: 4, kind: input, shape index: {}]
  %s5 = inlined_call_operand.vmem [shape: f32[48,128], index: 5, kind: output, shape index: {}]
  %s6 = sld [smem:[#allocation0]]
  $region57: #{actor_critic_forward.1} parent=0
    _
  %s8 = ssub.s32 1, %s6
  %s9 = scalar_select 0, %s8, %s6
  $region1: #{actor_critic_forward.1} parent=0
    #allocation2 [shape = 'u8[262144]{0}', space=vmem, size = 0x40000, scoped, tag = 'input window, operand 3, single buffered']
    #allocation3 [shape = 's32[2]{0}', space=sflag, size = 0x8, scoped, tag = 'scoped memory for actor_critic_forward.1']
    %10 = vsyncpa [#allocation3], 0
    loop: start=0, step=1, limit=5
    $region2: #{actor_critic_forward.1} parent=1 // loop_pre_header
      _
    $region3: #{actor_critic_forward.1} parent=1 // loop_header
      %s12 = sphi 0, %s16
      %p13 = scmp.ge.s32.totalorder %s12, 5
      %s22 = sphi 0, %s24
      %s25 = sphi 0, %s22
      %s26 = sphi 0, %s25
      %s42 = sphi 0, %s26
      %s46 = sphi 0, %s46
      %s48 = sphi 0, %s46
      %s49 = sphi 0, %s48
      %s63 = sphi 0, %s49
      %s67 = sphi 0, %s67
      %s69 = sphi 0, %s67
      %s70 = sphi 0, %s69
      %s84 = sphi 0, %s70
      %s88 = sphi 0, %s88
      %s90 = sphi 0, %s88
      %s91 = sphi 0, %s90
      %s105 = sphi 0, %s91
      %s109 = sphi 0, %s109
      %s111 = sphi 0, %s109
      %s112 = sphi 0, %s111
      %s126 = sphi 0, %s112
      %s132 = sphi 0, %s134
      %s135 = sphi 0, %s132
      %s136 = sphi 0, %s135
      %s152 = sphi 0, %s136
    $region4: #{actor_critic_forward.1} parent=1 // loop_header_branch
      %15 = sbr.rel (%p13) target = $region8
    $region5: #{actor_critic_forward.1} parent=1 // loop_body
      %s17 = ssub.s32 %s12, 1
      %s18 = ssub.s32 %s12, 2
      %s19 = sadd.s32 %s12, 1
      %s20 = ssub.s32 %s12, %s19
      %p21 = scmp.eq.s32.totalorder %s20, 0
      %s23 = sadd.s32 %s22, 1
      %s24 = scalar_select %p21, %s22, %s23
      %p27 = pneg %p21
      %p28 = scmp.eq.s32.totalorder %s12, 2
      %p29 = por %p27, %p28
      %p30 = scmp.ne.s32.totalorder %s22, %s25
      %p31 = scmp.eq.s32.totalorder %s12, 0
      %p32 = por %p30, %p31
      %p33 = scmp.ne.s32.totalorder %s22, %s25
      %p34 = scmp.eq.s32.totalorder %s17, 2
      %p35 = por %p33, %p34
      %p36 = scmp.ne.s32.totalorder %s25, %s26
      %p37 = scmp.eq.s32.totalorder %s17, 0
      %p38 = por %p36, %p37
      %p39 = scmp.ne.s32.totalorder %s25, %s26
      %p40 = scmp.eq.s32.totalorder %s18, 2
      %p41 = por %p39, %p40
      %p43 = scmp.ne.s32.totalorder %s26, %s42
      %p44 = scmp.eq.s32.totalorder %s18, 0
      %p45 = por %p43, %p44
      %s47 = sadd.s32 %s46, 1
      %p50 = scmp.eq.s32.totalorder %s12, 2
      %p51 = scmp.ne.s32.totalorder %s46, %s48
      %p52 = scmp.eq.s32.totalorder %s12, 0
      %p53 = por %p51, %p52
      %p54 = scmp.ne.s32.totalorder %s46, %s48
      %p55 = scmp.eq.s32.totalorder %s17, 2
      %p56 = por %p54, %p55
      %p57 = scmp.ne.s32.totalorder %s48, %s49
      %p58 = scmp.eq.s32.totalorder %s17, 0
      %p59 = por %p57, %p58
      %p60 = scmp.ne.s32.totalorder %s48, %s49
      %p61 = scmp.eq.s32.totalorder %s18, 2
      %p62 = por %p60, %p61
      %p64 = scmp.ne.s32.totalorder %s49, %s63
      %p65 = scmp.eq.s32.totalorder %s18, 0
      %p66 = por %p64, %p65
      %s68 = sadd.s32 %s67, 1
      %p71 = scmp.eq.s32.totalorder %s12, 2
      %p72 = scmp.ne.s32.totalorder %s67, %s69
      %p73 = scmp.eq.s32.totalorder %s12, 0
      %p74 = por %p72, %p73
      %p75 = scmp.ne.s32.totalorder %s67, %s69
      %p76 = scmp.eq.s32.totalorder %s17, 2
      %p77 = por %p75, %p76
      %p78 = scmp.ne.s32.totalorder %s69, %s70
      %p79 = scmp.eq.s32.totalorder %s17, 0
      %p80 = por %p78, %p79
      %p81 = scmp.ne.s32.totalorder %s69, %s70
      %p82 = scmp.eq.s32.totalorder %s18, 2
      %p83 = por %p81, %p82
      %p85 = scmp.ne.s32.totalorder %s70, %s84
      %p86 = scmp.eq.s32.totalorder %s18, 0
      %p87 = por %p85, %p86
      %s89 = sadd.s32 %s88, 1
      %p92 = scmp.eq.s32.totalorder %s12, 2
      %p93 = scmp.ne.s32.totalorder %s88, %s90
      %p94 = scmp.eq.s32.totalorder %s12, 0
      %p95 = por %p93, %p94
      %p96 = scmp.ne.s32.totalorder %s88, %s90
      %p97 = scmp.eq.s32.totalorder %s17, 2
      %p98 = por %p96, %p97
      %p99 = scmp.ne.s32.totalorder %s90, %s91
      %p100 = scmp.eq.s32.totalorder %s17, 0
      %p101 = por %p99, %p100
      %p102 = scmp.ne.s32.totalorder %s90, %s91
      %p103 = scmp.eq.s32.totalorder %s18, 2
      %p104 = por %p102, %p103
      %p106 = scmp.ne.s32.totalorder %s91, %s105
      %p107 = scmp.eq.s32.totalorder %s18, 0
      %p108 = por %p106, %p107
      %s110 = sadd.s32 %s109, 1
      %p113 = scmp.eq.s32.totalorder %s12, 2
      %p114 = scmp.ne.s32.totalorder %s109, %s111
      %p115 = scmp.eq.s32.totalorder %s12, 0
      %p116 = por %p114, %p115
      %p117 = scmp.ne.s32.totalorder %s109, %s111
      %p118 = scmp.eq.s32.totalorder %s17, 2
      %p119 = por %p117, %p118
      %p120 = scmp.ne.s32.totalorder %s111, %s112
      %p121 = scmp.eq.s32.totalorder %s17, 0
      %p122 = por %p120, %p121
      %p123 = scmp.ne.s32.totalorder %s111, %s112
      %p124 = scmp.eq.s32.totalorder %s18, 2
      %p125 = por %p123, %p124
      %p127 = scmp.ne.s32.totalorder %s112, %s126
      %p128 = scmp.eq.s32.totalorder %s18, 0
      %p129 = por %p127, %p128
      %s130 = ssub.s32 %s12, %s19
      %p131 = scmp.eq.s32.totalorder %s130, 0
      %s133 = sadd.s32 %s132, 1
      %s134 = scalar_select %p131, %s132, %s133
      %p137 = pneg %p131
      %p138 = scmp.eq.s32.totalorder %s12, 2
      %p139 = por %p137, %p138
      %p140 = scmp.ne.s32.totalorder %s132, %s135
      %p141 = scmp.eq.s32.totalorder %s12, 0
      %p142 = por %p140, %p141
      %p143 = scmp.ne.s32.totalorder %s132, %s135
      %p144 = scmp.eq.s32.totalorder %s17, 2
      %p145 = por %p143, %p144
      %p146 = scmp.ne.s32.totalorder %s135, %s136
      %p147 = scmp.eq.s32.totalorder %s17, 0
      %p148 = por %p146, %p147
      %p149 = scmp.ne.s32.totalorder %s135, %s136
      %p150 = scmp.eq.s32.totalorder %s18, 2
      %p151 = por %p149, %p150
      %p153 = scmp.ne.s32.totalorder %s136, %s152
      %p154 = scmp.eq.s32.totalorder %s18, 0
      %p155 = por %p153, %p154
      %p156 = scmp.le.s32.totalorder 1, %s12
      %p157 = scmp.lt.s32.totalorder %s12, 4
      %p158 = pnand %p156, %p157
      %p159 = pneg %p158
      // Predicated region
      $region9: #{actor_critic_forward.1} parent=5 // pred_check
        _
      $region10: #{actor_critic_forward.1} parent=5 // pred_check_branch
        %161 = sbr.rel (%p158) target = $region12
      $region11: #{actor_critic_forward.1} parent=5 // pred_region
        %s162 = ssub.s32 %s12, 1
        // Predicated region
        $region13: #{actor_critic_forward.1} parent=11 // pred_check
          %p163 = pneg %p59
        $region14: #{actor_critic_forward.1} parent=11 // pred_check_branch
          %165 = sbr.rel (%p163) target = $region16
        $region15: #{actor_critic_forward.1} parent=11 // pred_region
          _
        $region16: #{actor_critic_forward.1} parent=11 // pred_fallthru
          _
        // Predicated region
        $region17: #{actor_critic_forward.1} parent=11 // pred_check
          %p166 = pneg %p80
        $region18: #{actor_critic_forward.1} parent=11 // pred_check_branch
          %168 = sbr.rel (%p166) target = $region20
        $region19: #{actor_critic_forward.1} parent=11 // pred_region
          _
        $region20: #{actor_critic_forward.1} parent=11 // pred_fallthru
          _
        // Predicated region
        $region21: #{actor_critic_forward.1} parent=11 // pred_check
          %p169 = pneg %p101
        $region22: #{actor_critic_forward.1} parent=11 // pred_check_branch
          %171 = sbr.rel (%p169) target = $region24
        $region23: #{actor_critic_forward.1} parent=11 // pred_region
          %173 = vsyncadd [#allocation3], 0
          %s174 = sshll.u32 %s3, 4
          %s175 = int_to_ptr.hbm [resolvable:$true] %s174
          %s176 = sshll.u32 [#allocation2], 4
          %s177 = int_to_ptr.vmem [resolvable:$true] %s176
          %182 = dma.hbm_to_vmem [thread:$0]  %s175, 8192, %s177, [#allocation3], 128, 128, 8
        $region24: #{actor_critic_forward.1} parent=11 // pred_fallthru
          _
        // Predicated region
        $region25: #{actor_critic_forward.1} parent=11 // pred_check
          %p183 = pneg %p122
        $region26: #{actor_critic_forward.1} parent=11 // pred_check_branch
          %185 = sbr.rel (%p183) target = $region28
        $region27: #{actor_critic_forward.1} parent=11 // pred_region
          _
        $region28: #{actor_critic_forward.1} parent=11 // pred_fallthru
          _
      $region12: #{actor_critic_forward.1} parent=5 // pred_fallthru
        _
      %p186 = scmp.lt.s32.totalorder %s12, 3
      // Predicated region
      $region29: #{actor_critic_forward.1} parent=5 // pred_check
        %p187 = pneg %p186
      $region30: #{actor_critic_forward.1} parent=5 // pred_check_branch
        %189 = sbr.rel (%p187) target = $region32
      $region31: #{actor_critic_forward.1} parent=5 // pred_region
        // Predicated region
        $region33: #{actor_critic_forward.1} parent=31 // pred_check
          %p190 = pneg %p32
        $region34: #{actor_critic_forward.1} parent=31 // pred_check_branch
          %192 = sbr.rel (%p190) target = $region36
        $region35: #{actor_critic_forward.1} parent=31 // pred_region
          %s193 = smul.u32 2, %s12
          %p194 = scmp.lt.s32.totalorder %s193, 5
          %s195 = scalar_select %p194, %s193, 5
          %s196 = smul.addr %s195, 8
          %s197 = scalar_lea.vmem %s0, %s196
          %s198 = smul.u32 2, %s12
        $region36: #{actor_critic_forward.1} parent=31 // pred_fallthru
          _
      $region32: #{actor_critic_forward.1} parent=5 // pred_fallthru
        _
      %p199 = scmp.le.s32.totalorder 1, %s12
      %p200 = scmp.lt.s32.totalorder %s12, 4
      %p201 = pnand %p199, %p200
      %p202 = pneg %p201
      // Predicated region
      $region37: #{actor_critic_forward.1} parent=5 // pred_check
        _
      $region38: #{actor_critic_forward.1} parent=5 // pred_check_branch
        %204 = sbr.rel (%p201) target = $region40
      $region39: #{actor_critic_forward.1} parent=5 // pred_region
        %s205 = ssub.s32 %s12, 1
        // Predicated region
        $region41: #{actor_critic_forward.1} parent=39 // pred_check
          %p206 = pneg %p101
        $region42: #{actor_critic_forward.1} parent=39 // pred_check_branch
          %208 = sbr.rel (%p206) target = $region44
        $region43: #{actor_critic_forward.1} parent=39 // pred_region
          %210 = dma.done [#allocation3], 8192
        $region44: #{actor_critic_forward.1} parent=39 // pred_fallthru
          _
        %s211 = smul.u32 2, %s17
        %p212 = scmp.lt.s32.totalorder %s211, 5
        %s213 = scalar_select %p212, %s211, 5
        %s214 = smul.addr %s213, 8
        %s215 = scalar_lea.vmem %s0, %s214
        %p216 = pneg %p38
        %p217 = pneg %p35
        %p218 = pneg %p59
        %p219 = pneg %p56
        %p220 = pneg %p80
        %p221 = pneg %p77
        %p222 = pneg %p101
        %p223 = pneg %p98
        %p224 = pneg %p122
        %p225 = pneg %p119
        %p226 = pneg %p148
        %p227 = pneg %p145
        %s228 = smul.u32 2, %s17
        %p229 = scmp.lt.s32.totalorder %s228, 5
        %s230 = scalar_select %p229, %s228, 5
        %s231 = smul.addr %s230, 8
        %s232 = scalar_lea.vmem %s5, %s231
        %s233 = smul.u32 2, %s17
        %p234 = scmp.lt.s32.totalorder %s233, 5
        %s235 = scalar_select %p234, %s233, 5
        %s236 = smul.addr %s235, 8
        %s237 = scalar_lea.vmem %s0, %s236
        %s238 = smul.u32 2, %s17
        %s239 = smul.u32 2, %s17
        %p240 = scmp.lt.s32.totalorder %s239, 5
        %s241 = scalar_select %p240, %s239, 5
        %s242 = smul.addr %s241, 8
        %s243 = scalar_lea.vmem %s5, %s242
        %s244 = smul.u32 2, %s17
        %v245 = vld [vmem:[%s237] sm:$0xff]
        %v246 = vld [vmem:[%s237 + $0x8] sm:$0xff]
        %v247 = vld [vmem:[%s1] sm:$0xff]
        %v248 = vld [vmem:[%s2] sm:$0xf]
        %250 = vset.pattern.permute.xlu0 0
        %251 = vperm.xlu0 %250, %v245
        %v252 = vpop.permute.xlu0 %251
        %255 = vset.pattern.permute.xlu0 0
        %256 = vperm.xlu0 %255, %v246
        %v257 = vpop.permute.xlu0 %256
        %v260 = vperm.slane %v247, 0
        %v261 = vperm.slane %v247, 2
        %v262 = vperm.slane %v247, 4
        %v263 = vperm.slane %v247, 6
        %v268 = vperm.slane %v260, 0
        %v269 = vperm.slane %v261, 0
        %v270 = vperm.slane %v262, 0
        %v271 = vperm.slane %v263, 0
        %v272 = vmul.f32 %v252, %v268
        %v273 = vmul.f32 %v252, %v269
        %v274 = vmul.f32 %v252, %v270
        %v275 = vmul.f32 %v252, %v271
        %v276 = vmul.f32 %v257, %v268
        %v277 = vmul.f32 %v257, %v269
        %v278 = vmul.f32 %v257, %v270
        %v279 = vmul.f32 %v257, %v271
        %280 = vset.pattern.permute.xlu0 1
        %281 = vperm.xlu0 %280, %v245
        %v282 = vpop.permute.xlu0 %281
        %284 = vset.pattern.permute.xlu0 1
        %285 = vperm.xlu0 %284, %v246
        %v286 = vpop.permute.xlu0 %285
        %v288 = vperm.slane %v247, 1
        %v289 = vperm.slane %v247, 3
        %v290 = vperm.slane %v247, 5
        %v291 = vperm.slane %v247, 7
        %v296 = vperm.slane %v288, 1
        %v297 = vperm.slane %v289, 1
        %v298 = vperm.slane %v290, 1
        %v299 = vperm.slane %v291, 1
        %v300 = vmul.f32 %v282, %v296
        %v301 = vmul.f32 %v282, %v297
        %v302 = vmul.f32 %v282, %v298
        %v303 = vmul.f32 %v282, %v299
        %v304 = vmul.f32 %v286, %v296
        %v305 = vmul.f32 %v286, %v297
        %v306 = vmul.f32 %v286, %v298
        %v307 = vmul.f32 %v286, %v299
        %v308 = vadd.f32 %v272, %v300
        %v309 = vadd.f32 %v273, %v301
        %v310 = vadd.f32 %v274, %v302
        %v311 = vadd.f32 %v275, %v303
        %v312 = vadd.f32 %v276, %v304
        %v313 = vadd.f32 %v277, %v305
        %v314 = vadd.f32 %v278, %v306
        %v315 = vadd.f32 %v279, %v307
        %v317 = vperm.slane %v248, 0
        %v318 = vperm.slane %v248, 1
        %v319 = vperm.slane %v248, 2
        %v320 = vperm.slane %v248, 3
        %v325 = vadd.f32 %v308, %v317
        %v326 = vadd.f32 %v309, %v318
        %v327 = vadd.f32 %v310, %v319
        %v328 = vadd.f32 %v311, %v320
        %v329 = vadd.f32 %v312, %v317
        %v330 = vadd.f32 %v313, %v318
        %v331 = vadd.f32 %v314, %v319
        %v332 = vadd.f32 %v315, %v320
        %v333 = vmax.f32 %v325, 0.0
        %v334 = vmax.f32 %v326, 0.0
        %v335 = vmax.f32 %v327, 0.0
        %v336 = vmax.f32 %v328, 0.0
        %v337 = vmax.f32 %v329, 0.0
        %v338 = vmax.f32 %v330, 0.0
        %v339 = vmax.f32 %v331, 0.0
        %v340 = vmax.f32 %v332, 0.0
        %v341 = vld [vmem:[#allocation2] sm:$0xff]
        %v342 = vld [vmem:[#allocation2 + $0x8] sm:$0xff]
        %v343 = vld [vmem:[#allocation2 + $0x10] sm:$0xff]
        %v344 = vld [vmem:[#allocation2 + $0x18] sm:$0xff]
        %v345 = vld [vmem:[#allocation2 + $0x20] sm:$0xff]
        %v346 = vld [vmem:[#allocation2 + $0x28] sm:$0xff]
        %v347 = vld [vmem:[#allocation2 + $0x30] sm:$0xff]
        %v348 = vld [vmem:[#allocation2 + $0x38] sm:$0xff]
        %v349 = vld [vmem:[#allocation2 + $0x40] sm:$0xff]
        %v350 = vld [vmem:[#allocation2 + $0x48] sm:$0xff]
        %v351 = vld [vmem:[#allocation2 + $0x50] sm:$0xff]
        %v352 = vld [vmem:[#allocation2 + $0x58] sm:$0xff]
        %v353 = vld [vmem:[#allocation2 + $0x60] sm:$0xff]
        %v354 = vld [vmem:[#allocation2 + $0x68] sm:$0xff]
        %v355 = vld [vmem:[#allocation2 + $0x70] sm:$0xff]
        %v356 = vld [vmem:[#allocation2 + $0x78] sm:$0xff]
        %v357 = vld [vmem:[#allocation2 + $0x80] sm:$0xff]
        %v358 = vld [vmem:[#allocation2 + $0x88] sm:$0xff]
        %v359 = vld [vmem:[#allocation2 + $0x90] sm:$0xff]
        %v360 = vld [vmem:[#allocation2 + $0x98] sm:$0xff]
        %v361 = vld [vmem:[#allocation2 + $0xa0] sm:$0xff]
        %v362 = vld [vmem:[#allocation2 + $0xa8] sm:$0xff]
        %v363 = vld [vmem:[#allocation2 + $0xb0] sm:$0xff]
        %v364 = vld [vmem:[#allocation2 + $0xb8] sm:$0xff]
        %v365 = vld [vmem:[#allocation2 + $0xc0] sm:$0xff]
        %v366 = vld [vmem:[#allocation2 + $0xc8] sm:$0xff]
        %v367 = vld [vmem:[#allocation2 + $0xd0] sm:$0xff]
        %v368 = vld [vmem:[#allocation2 + $0xd8] sm:$0xff]
        %v369 = vld [vmem:[#allocation2 + $0xe0] sm:$0xff]
        %v370 = vld [vmem:[#allocation2 + $0xe8] sm:$0xff]
        %v371 = vld [vmem:[#allocation2 + $0xf0] sm:$0xff]
        %v372 = vld [vmem:[#allocation2 + $0xf8] sm:$0xff]
        %v373 = vld [vmem:[#allocation2 + $0x100] sm:$0xff]
        %v374 = vld [vmem:[#allocation2 + $0x108] sm:$0xff]
        %v375 = vld [vmem:[#allocation2 + $0x110] sm:$0xff]
        %v376 = vld [vmem:[#allocation2 + $0x118] sm:$0xff]
        %v377 = vld [vmem:[#allocation2 + $0x120] sm:$0xff]
        %v378 = vld [vmem:[#allocation2 + $0x128] sm:$0xff]
        %v379 = vld [vmem:[#allocation2 + $0x130] sm:$0xff]
        %v380 = vld [vmem:[#allocation2 + $0x138] sm:$0xff]
        %v381 = vld [vmem:[#allocation2 + $0x140] sm:$0xff]
        %v382 = vld [vmem:[#allocation2 + $0x148] sm:$0xff]
        %v383 = vld [vmem:[#allocation2 + $0x150] sm:$0xff]
        %v384 = vld [vmem:[#allocation2 + $0x158] sm:$0xff]
        %v385 = vld [vmem:[#allocation2 + $0x160] sm:$0xff]
        %v386 = vld [vmem:[#allocation2 + $0x168] sm:$0xff]
        %v387 = vld [vmem:[#allocation2 + $0x170] sm:$0xff]
        %v388 = vld [vmem:[#allocation2 + $0x178] sm:$0xff]
        %v389 = vld [vmem:[#allocation2 + $0x180] sm:$0xff]
        %v390 = vld [vmem:[#allocation2 + $0x188] sm:$0xff]
        %v391 = vld [vmem:[#allocation2 + $0x190] sm:$0xff]
        %v392 = vld [vmem:[#allocation2 + $0x198] sm:$0xff]
        %v393 = vld [vmem:[#allocation2 + $0x1a0] sm:$0xff]
        %v394 = vld [vmem:[#allocation2 + $0x1a8] sm:$0xff]
        %v395 = vld [vmem:[#allocation2 + $0x1b0] sm:$0xff]
        %v396 = vld [vmem:[#allocation2 + $0x1b8] sm:$0xff]
        %v397 = vld [vmem:[#allocation2 + $0x1c0] sm:$0xff]
        %v398 = vld [vmem:[#allocation2 + $0x1c8] sm:$0xff]
        %v399 = vld [vmem:[#allocation2 + $0x1d0] sm:$0xff]
        %v400 = vld [vmem:[#allocation2 + $0x1d8] sm:$0xff]
        %v401 = vld [vmem:[#allocation2 + $0x1e0] sm:$0xff]
        %v402 = vld [vmem:[#allocation2 + $0x1e8] sm:$0xff]
        %v403 = vld [vmem:[#allocation2 + $0x1f0] sm:$0xff]
        %v404 = vld [vmem:[#allocation2 + $0x1f8] sm:$0xff]
        %v405 = vld [vmem:[%s4] sm:$0x1]
        %v407 = vperm.slane %v405, 0
        %409 = vmatpush.msra.mxu0 %v356
        %410 = vmatpush.msra.mxu0 %v355
        %411 = vmatpush.msra.mxu0 %v354
        %412 = vmatpush.msra.mxu0 %v353
        %413 = vmatpush.msra.mxu0 %v352
        %414 = vmatpush.msra.mxu0 %v351
        %415 = vmatpush.msra.mxu0 %v350
        %416 = vmatpush.msra.mxu0 %v349
        %417 = vmatpush.msra.mxu0 %v348
        %418 = vmatpush.msra.mxu0 %v347
        %419 = vmatpush.msra.mxu0 %v346
        %420 = vmatpush.msra.mxu0 %v345
        %421 = vmatpush.msra.mxu0 %v344
        %422 = vmatpush.msra.mxu0 %v343
        %423 = vmatpush.msra.mxu0 %v342
        %424 = vmatpush.msra.mxu0 %v341
        %425 = vmatmul.f32.gmra.mxu0 %v333
        %v426 = vpop.f32.mrf.mxu0
        %v427 = vadd.f32 %v407, %v426
        %428 = vmatmul.f32.gmra.mxu0 %v337
        %v429 = vpop.f32.mrf.mxu0
        %v430 = vadd.f32 %v407, %v429
        %431 = vdwg.mxu0
        %432 = vmatpush.msra.mxu0 %v372
        %433 = vmatpush.msra.mxu0 %v371
        %434 = vmatpush.msra.mxu0 %v370
        %435 = vmatpush.msra.mxu0 %v369
        %436 = vmatpush.msra.mxu0 %v368
        %437 = vmatpush.msra.mxu0 %v367
        %438 = vmatpush.msra.mxu0 %v366
        %439 = vmatpush.msra.mxu0 %v365
        %440 = vmatpush.msra.mxu0 %v364
        %441 = vmatpush.msra.mxu0 %v363
        %442 = vmatpush.msra.mxu0 %v362
        %443 = vmatpush.msra.mxu0 %v361
        %444 = vmatpush.msra.mxu0 %v360
        %445 = vmatpush.msra.mxu0 %v359
        %446 = vmatpush.msra.mxu0 %v358
        %447 = vmatpush.msra.mxu0 %v357
        %448 = vmatmul.f32.gmra.mxu0 %v334
        %v449 = vpop.f32.mrf.mxu0
        %v450 = vadd.f32 %v427, %v449
        %451 = vmatmul.f32.gmra.mxu0 %v338
        %v452 = vpop.f32.mrf.mxu0
        %v453 = vadd.f32 %v430, %v452
        %454 = vdwg.mxu0
        %455 = vmatpush.msra.mxu0 %v388
        %456 = vmatpush.msra.mxu0 %v387
        %457 = vmatpush.msra.mxu0 %v386
        %458 = vmatpush.msra.mxu0 %v385
        %459 = vmatpush.msra.mxu0 %v384
        %460 = vmatpush.msra.mxu0 %v383
        %461 = vmatpush.msra.mxu0 %v382
        %462 = vmatpush.msra.mxu0 %v381
        %463 = vmatpush.msra.mxu0 %v380
        %464 = vmatpush.msra.mxu0 %v379
        %465 = vmatpush.msra.mxu0 %v378
        %466 = vmatpush.msra.mxu0 %v377
        %467 = vmatpush.msra.mxu0 %v376
        %468 = vmatpush.msra.mxu0 %v375
        %469 = vmatpush.msra.mxu0 %v374
        %470 = vmatpush.msra.mxu0 %v373
        %471 = vmatmul.f32.gmra.mxu0 %v335
        %v472 = vpop.f32.mrf.mxu0
        %v473 = vadd.f32 %v450, %v472
        %474 = vmatmul.f32.gmra.mxu0 %v339
        %v475 = vpop.f32.mrf.mxu0
        %v476 = vadd.f32 %v453, %v475
        %477 = vdwg.mxu0
        %478 = vmatpush.msra.mxu0 %v404
        %479 = vmatpush.msra.mxu0 %v403
        %480 = vmatpush.msra.mxu0 %v402
        %481 = vmatpush.msra.mxu0 %v401
        %482 = vmatpush.msra.mxu0 %v400
        %483 = vmatpush.msra.mxu0 %v399
        %484 = vmatpush.msra.mxu0 %v398
        %485 = vmatpush.msra.mxu0 %v397
        %486 = vmatpush.msra.mxu0 %v396
        %487 = vmatpush.msra.mxu0 %v395
        %488 = vmatpush.msra.mxu0 %v394
        %489 = vmatpush.msra.mxu0 %v393
        %490 = vmatpush.msra.mxu0 %v392
        %491 = vmatpush.msra.mxu0 %v391
        %492 = vmatpush.msra.mxu0 %v390
        %493 = vmatpush.msra.mxu0 %v389
        %494 = vmatmul.f32.gmra.mxu0 %v336
        %v495 = vpop.f32.mrf.mxu0
        %v496 = vadd.f32 %v473, %v495
        %497 = vmatmul.f32.gmra.mxu0 %v340
        %v498 = vpop.f32.mrf.mxu0
        %v499 = vadd.f32 %v476, %v498
        %500 = vdwg.mxu0
        %501 = vst [vmem:[%s243] sm:$0xff] %v496
        %502 = vst [vmem:[%s243 + $0x8] sm:$0xff] %v499
        %s503 = smul.u32 2, %s17
        %p504 = scmp.lt.s32.totalorder %s503, 5
        %s505 = scalar_select %p504, %s503, 5
        %s506 = smul.addr %s505, 8
        %s507 = scalar_lea.vmem %s5, %s506
        // Predicated region
        $region45: #{actor_critic_forward.1} parent=39 // pred_check
          %p508 = pneg %p145
        $region46: #{actor_critic_forward.1} parent=39 // pred_check_branch
          %510 = sbr.rel (%p508) target = $region48
        $region47: #{actor_critic_forward.1} parent=39 // pred_region
          %s511 = smul.u32 2, %s17
        $region48: #{actor_critic_forward.1} parent=39 // pred_fallthru
          _
      $region40: #{actor_critic_forward.1} parent=5 // pred_fallthru
        _
      %p512 = scmp.le.s32.totalorder 2, %s12
      // Predicated region
      $region49: #{actor_critic_forward.1} parent=5 // pred_check
        %p513 = pneg %p512
      $region50: #{actor_critic_forward.1} parent=5 // pred_check_branch
        %515 = sbr.rel (%p513) target = $region52
      $region51: #{actor_critic_forward.1} parent=5 // pred_region
        %s516 = ssub.s32 %s12, 2
        // Predicated region
        $region53: #{actor_critic_forward.1} parent=51 // pred_check
          %p517 = pneg %p151
        $region54: #{actor_critic_forward.1} parent=51 // pred_check_branch
          %519 = sbr.rel (%p517) target = $region56
        $region55: #{actor_critic_forward.1} parent=51 // pred_region
          %s520 = smul.u32 2, %s18
          %p521 = scmp.lt.s32.totalorder %s520, 5
          %s522 = scalar_select %p521, %s520, 5
          %s523 = smul.addr %s522, 8
          %s524 = scalar_lea.vmem %s5, %s523
        $region56: #{actor_critic_forward.1} parent=51 // pred_fallthru
          _
      $region52: #{actor_critic_forward.1} parent=5 // pred_fallthru
        _
    $region6: #{actor_critic_forward.1} parent=1 // loop_footer
      %s16 = sadd.s32 1, %s12
    $region7: #{actor_critic_forward.1} parent=1 // loop_footer_branch
      %11 = sbr.rel target = $region3
    $region8: #{actor_critic_forward.1} parent=1 // loop_exit
      _
    %525 = vsyncpa [#allocation3], 1
    %s526 = scalar_lea.sflag [#allocation3], 1
    %527 = vsyncpa %s526, 1

</llo_original>
